<compile_context>
chip_gen: v7x
topology: tpu7x:2x2x1
jax: 0.10.0
libtpu: 0.0.40
codegen_flags: <defaults>
</compile_context>

<pallas_src>
import functools
import math

import jax
import jax.numpy as jnp
import numpy as np
from jax.experimental import pallas as pl
from jax.experimental.pallas import tpu as pltpu


def tsa_kernel(x_ref, tg_ref,
               wq_ref, bq_ref, wk_ref, bk_ref, wv_ref, bv_ref,
               w1_ref, b1_ref, w2_ref, b2_ref, w3_ref, b3_ref,
               out_ref, *, block_b, seq_len):
    m_rows, d = x_ref.shape            # m_rows = block_b * seq_len (static)
    x = x_ref[...]                     # (M, D)

    # --- QKV projections: (M, D) @ (D, D) MXU matmuls with M = block_b*S ---
    q = jnp.dot(x, wq_ref[...], preferred_element_type=jnp.float32) + bq_ref[...]
    k = jnp.dot(x, wk_ref[...], preferred_element_type=jnp.float32) + bk_ref[...]
    v = jnp.dot(x, wv_ref[...], preferred_element_type=jnp.float32) + bv_ref[...]

    # --- ComplexTimeScaling MLP, flattened over all block_b*S rows ---
    tg = tg_ref[...]                                                   # (M, 1)
    h1 = jnp.maximum(tg * w1_ref[...] + b1_ref[...], 0.0)              # (M, H)
    h2 = jnp.maximum(
        jnp.dot(h1, w2_ref[...], preferred_element_type=jnp.float32) + b2_ref[...],
        0.0)                                                           # (M, H)
    ts = jax.nn.sigmoid(
        jnp.dot(h2, w3_ref[...], preferred_element_type=jnp.float32)
        + b3_ref[0])                                                   # (M, 1)

    # Fold both the per-row time scale and the 1/sqrt(d) attention scale into
    # Q before the QK^T matmul: ts broadcasts over the key axis, so
    # (q*ts) @ k^T == ts * (q @ k^T).  Scaling touches M*D elements instead of
    # the full (Bb, S, S) score matrix.
    q = q * (ts * (1.0 / math.sqrt(d)))                                # (M, D)

    # --- attention, batched over the block_b batches of this step ---
    # Leading-dim splits only (layout-preserving reshapes).
    q3 = q.reshape(block_b, seq_len, d)
    k3 = k.reshape(block_b, seq_len, d)
    v3 = v.reshape(block_b, seq_len, d)

    # Contracted-last-dim dot_general: K is consumed as the transposed MXU
    # operand directly; no explicit k.T (XLU) round-trip.
    scores = jnp.einsum('bqd,bkd->bqk', q3, k3,
                        preferred_element_type=jnp.float32)            # (Bb,S,S)

    m = jnp.max(scores, axis=-1, keepdims=True)
    e = jnp.exp(scores - m)
    denom = jnp.sum(e, axis=-1, keepdims=True)                         # (Bb,S,1)

    # Defer softmax normalization until after the PV matmul: scaling touches
    # S*D elements instead of S*S, and the reciprocal goes to the EUP slot.
    pv = jnp.einsum('bqk,bkd->bqd', e, v3,
                    preferred_element_type=jnp.float32)                # (Bb,S,D)
    out = pv * pl.reciprocal(denom, approx=True)

    out_ref[...] = out.reshape(m_rows, d)
    # TODO(synk): for D < 128 the output store is lane-masked; a lane-dense
    # (block_b, S*D) output slab would need an in-kernel lane-changing
    # relayout and is left as a follow-up.
    # TODO(synk): for large S, replace the monolithic (S,S) scores with
    # flash-style KV tiling (online softmax) to stay inside VMEM (mandatory on
    # v7x), and single-buffer the constant-index weight specs.


def _choose_block_b(batch, seq_len, target_rows=256):
    """Largest divisor of `batch` such that block_b*seq_len ~ target_rows."""
    bb = max(1, min(batch, target_rows // max(seq_len, 1)))
    while batch % bb:
        bb -= 1
    # Megacore: prefer >= 2 grid steps, but only if the flattened M dimension
    # stays at least one full MXU pass (128 rows).
    if batch // bb < 2:
        for cand in range(bb - 1, 0, -1):
            if batch % cand == 0 and cand * seq_len >= 128:
                bb = cand
                break
    return bb


def time_scaled_attention(x, time_gaps, params, *, block_b=None):
    """x: (B, S, D) f32, time_gaps: (B, S) f32."""
    B, S, D = x.shape
    H = params["w1"].shape[1]
    if block_b is None:
        block_b = _choose_block_b(B, S)
    assert B % block_b == 0
    mb = block_b * S

    # Flatten batch into the matmul M dimension (row-major -> free reshape).
    x2 = x.reshape(B * S, D)
    tg2 = time_gaps.reshape(B * S, 1)

    const2d = lambda shape: pl.BlockSpec(shape, lambda b: (0, 0))
    kernel = functools.partial(tsa_kernel, block_b=block_b, seq_len=S)

    out2 = pl.pallas_call(
        kernel,
        out_shape=jax.ShapeDtypeStruct((B * S, D), jnp.float32),
        grid=(B // block_b,),
        in_specs=[
            pl.BlockSpec((mb, D), lambda b: (b, 0)),    # x (flattened)
            pl.BlockSpec((mb, 1), lambda b: (b, 0)),    # time_gaps (flattened)
            const2d((D, D)), const2d((1, D)),           # wq, bq
            const2d((D, D)), const2d((1, D)),           # wk, bk
            const2d((D, D)), const2d((1, D)),           # wv, bv
            const2d((1, H)), const2d((1, H)),           # w1, b1
            const2d((H, H)), const2d((1, H)),           # w2, b2
            const2d((H, 1)),                            # w3 (column form, MXU dot)
            pl.BlockSpec(memory_space=pltpu.MemorySpace.SMEM),  # b3 scalar
        ],
        out_specs=pl.BlockSpec((mb, D), lambda b: (b, 0)),
        compiler_params=pltpu.CompilerParams(
            dimension_semantics=("parallel",)),
    )(x2, tg2,
      params["wq"], params["bq"], params["wk"], params["bk"],
      params["wv"], params["bv"],
      params["w1"], params["b1"], params["w2"], params["b2"],
      params["w3"], params["b3"])

    return out2.reshape(B, S, D)


def reference(x, time_gaps, params):
    """Pure-JAX reference mirroring the PyTorch forward."""
    q = x @ params["wq"] + params["bq"]
    k = x @ params["wk"] + params["bk"]
    v = x @ params["wv"] + params["bv"]
    scores = jnp.einsum("bsd,btd->bst", q, k) / (x.shape[-1] ** 0.5)
    tg = time_gaps[..., None]                                      # (B, S, 1)
    h1 = jnp.maximum(tg * params["w1"] + params["b1"], 0.0)
    h2 = jnp.maximum(h1 @ params["w2"] + params["b2"], 0.0)
    ts = jax.nn.sigmoid(h2 @ params["w3"] + params["b3"])          # (B, S, 1)
    scores = scores * ts
    probs = jax.nn.softmax(scores, axis=-1)
    return jnp.einsum("bst,btd->bsd", probs, v)


def init_params(key, dim, hidden=64):
    """Deterministic init mimicking PyTorch nn.Linear defaults (U(-1/sqrt(fan_in), +...))."""
    def linear(k, fan_in, fan_out):
        kw, kb = jax.random.split(k)
        bound = 1.0 / math.sqrt(fan_in)
        w = jax.random.uniform(kw, (fan_in, fan_out), jnp.float32, -bound, bound)
        b = jax.random.uniform(kb, (1, fan_out), jnp.float32, -bound, bound)
        return w, b

    ks = jax.random.split(key, 6)
    wq, bq = linear(ks[0], dim, dim)
    wk, bk = linear(ks[1], dim, dim)
    wv, bv = linear(ks[2], dim, dim)
    w1, b1 = linear(ks[3], 1, hidden)         # Linear(1, hidden)
    w2, b2 = linear(ks[4], hidden, hidden)    # Linear(hidden, hidden)
    w3, b3 = linear(ks[5], hidden, 1)         # Linear(hidden, 1)
    return {
        "wq": wq, "bq": bq, "wk": wk, "bk": bk, "wv": wv, "bv": bv,
        "w1": w1, "b1": b1, "w2": w2, "b2": b2,
        "w3": w3,                              # (hidden, 1) column for MXU dot
        "b3": b3.reshape(1),                   # true scalar -> SMEM
    }


if __name__ == "__main__":
    B, S, D, H = 2, 8, 32, 64
    key = jax.random.PRNGKey(0)
    kx, kt, kp = jax.random.split(key, 3)

    x = jax.random.normal(kx, (B, S, D), jnp.float32)
    time_gaps = jax.random.uniform(kt, (B, S), jnp.float32, 0.0, 2.0)
    params = init_params(kp, D, H)

    out = time_scaled_attention(x, time_gaps, params)
    out = jax.block_until_ready(out)

    ref = reference(x, time_gaps, params)
    # Tolerance relaxed vs. 1e-5 because the kernel uses the EUP approximate
    # reciprocal for the softmax denominator.
    np.testing.assert_allclose(np.asarray(out), np.asarray(ref),
                               rtol=2e-3, atol=2e-3)

    print("KERNEL_OK")
</pallas_src>

<mosaic_0001>
module attributes {stable_mosaic.version = 11 : i64} {
  func.func @tsa_kernel(%arg0: i32, %arg1: memref<16x32xf32, #tpu.memory_space<vmem>>, %arg2: memref<16x1xf32, #tpu.memory_space<vmem>>, %arg3: memref<32x32xf32, #tpu.memory_space<vmem>>, %arg4: memref<1x32xf32, #tpu.memory_space<vmem>>, %arg5: memref<32x32xf32, #tpu.memory_space<vmem>>, %arg6: memref<1x32xf32, #tpu.memory_space<vmem>>, %arg7: memref<32x32xf32, #tpu.memory_space<vmem>>, %arg8: memref<1x32xf32, #tpu.memory_space<vmem>>, %arg9: memref<1x64xf32, #tpu.memory_space<vmem>>, %arg10: memref<1x64xf32, #tpu.memory_space<vmem>>, %arg11: memref<64x64xf32, #tpu.memory_space<vmem>>, %arg12: memref<1x64xf32, #tpu.memory_space<vmem>>, %arg13: memref<64x1xf32, #tpu.memory_space<vmem>>, %arg14: memref<1xf32, #tpu.memory_space<smem>>, %arg15: memref<16x32xf32, #tpu.memory_space<vmem>>) attributes {dimension_semantics = [#tpu.dimension_semantics<parallel>], iteration_bounds = array<i64: 1>, scalar_prefetch = 0 : i64, scratch_operands = 0 : i64, tpu.core_type = #tpu.core_type<tc>, window_params = [{transform_indices = @transform_0, window_bounds = array<i64: 16, 32>}, {transform_indices = @transform_1, window_bounds = array<i64: 16, 1>}, {pipeline_mode = #tpu.pipeline_mode<synchronous>, transform_indices = @transform_2, window_bounds = array<i64: 32, 32>}, {pipeline_mode = #tpu.pipeline_mode<synchronous>, transform_indices = @transform_3, window_bounds = array<i64: 1, 32>}, {pipeline_mode = #tpu.pipeline_mode<synchronous>, transform_indices = @transform_4, window_bounds = array<i64: 32, 32>}, {pipeline_mode = #tpu.pipeline_mode<synchronous>, transform_indices = @transform_5, window_bounds = array<i64: 1, 32>}, {pipeline_mode = #tpu.pipeline_mode<synchronous>, transform_indices = @transform_6, window_bounds = array<i64: 32, 32>}, {pipeline_mode = #tpu.pipeline_mode<synchronous>, transform_indices = @transform_7, window_bounds = array<i64: 1, 32>}, {pipeline_mode = #tpu.pipeline_mode<synchronous>, transform_indices = @transform_8, window_bounds = array<i64: 1, 64>}, {pipeline_mode = #tpu.pipeline_mode<synchronous>, transform_indices = @transform_9, window_bounds = array<i64: 1, 64>}, {pipeline_mode = #tpu.pipeline_mode<synchronous>, transform_indices = @transform_10, window_bounds = array<i64: 64, 64>}, {pipeline_mode = #tpu.pipeline_mode<synchronous>, transform_indices = @transform_11, window_bounds = array<i64: 1, 64>}, {pipeline_mode = #tpu.pipeline_mode<synchronous>, transform_indices = @transform_12, window_bounds = array<i64: 64, 1>}, {transform_indices = @transform_13, window_bounds = array<i64: 1>}, {transform_indices = @transform_14, window_bounds = array<i64: 16, 32>}]} {
    %c0 = arith.constant 0 : index
    %c0_0 = arith.constant 0 : index
    %0 = vector.load %arg1[%c0, %c0_0] : memref<16x32xf32, #tpu.memory_space<vmem>>, vector<16x32xf32>
    %c0_1 = arith.constant 0 : index
    %c0_2 = arith.constant 0 : index
    %1 = vector.load %arg3[%c0_1, %c0_2] : memref<32x32xf32, #tpu.memory_space<vmem>>, vector<32x32xf32>
    %cst = arith.constant dense<0.000000e+00> : vector<16x32xf32>
    %2 = tpu.matmul %0, %1, %cst {dimension_numbers = #tpu.dot_dimension_numbers<[1], [0], [0], [1], [0, 0, 1, 1], [], []>} : vector<16x32xf32>, vector<32x32xf32>, vector<16x32xf32> -> vector<16x32xf32>
    %c0_3 = arith.constant 0 : index
    %c0_4 = arith.constant 0 : index
    %3 = vector.load %arg4[%c0_3, %c0_4] : memref<1x32xf32, #tpu.memory_space<vmem>>, vector<1x32xf32>
    %4 = vector.broadcast %3 : vector<1x32xf32> to vector<16x32xf32>
    %5 = arith.addf %2, %4 : vector<16x32xf32>
    %c0_5 = arith.constant 0 : index
    %c0_6 = arith.constant 0 : index
    %6 = vector.load %arg5[%c0_5, %c0_6] : memref<32x32xf32, #tpu.memory_space<vmem>>, vector<32x32xf32>
    %cst_7 = arith.constant dense<0.000000e+00> : vector<16x32xf32>
    %7 = tpu.matmul %0, %6, %cst_7 {dimension_numbers = #tpu.dot_dimension_numbers<[1], [0], [0], [1], [0, 0, 1, 1], [], []>} : vector<16x32xf32>, vector<32x32xf32>, vector<16x32xf32> -> vector<16x32xf32>
    %c0_8 = arith.constant 0 : index
    %c0_9 = arith.constant 0 : index
    %8 = vector.load %arg6[%c0_8, %c0_9] : memref<1x32xf32, #tpu.memory_space<vmem>>, vector<1x32xf32>
    %9 = vector.broadcast %8 : vector<1x32xf32> to vector<16x32xf32>
    %10 = arith.addf %7, %9 : vector<16x32xf32>
    %c0_10 = arith.constant 0 : index
    %c0_11 = arith.constant 0 : index
    %11 = vector.load %arg7[%c0_10, %c0_11] : memref<32x32xf32, #tpu.memory_space<vmem>>, vector<32x32xf32>
    %cst_12 = arith.constant dense<0.000000e+00> : vector<16x32xf32>
    %12 = tpu.matmul %0, %11, %cst_12 {dimension_numbers = #tpu.dot_dimension_numbers<[1], [0], [0], [1], [0, 0, 1, 1], [], []>} : vector<16x32xf32>, vector<32x32xf32>, vector<16x32xf32> -> vector<16x32xf32>
    %c0_13 = arith.constant 0 : index
    %c0_14 = arith.constant 0 : index
    %13 = vector.load %arg8[%c0_13, %c0_14] : memref<1x32xf32, #tpu.memory_space<vmem>>, vector<1x32xf32>
    %14 = vector.broadcast %13 : vector<1x32xf32> to vector<16x32xf32>
    %15 = arith.addf %12, %14 : vector<16x32xf32>
    %c0_15 = arith.constant 0 : index
    %c0_16 = arith.constant 0 : index
    %16 = vector.load %arg2[%c0_15, %c0_16] : memref<16x1xf32, #tpu.memory_space<vmem>>, vector<16x1xf32>
    %c0_17 = arith.constant 0 : index
    %c0_18 = arith.constant 0 : index
    %17 = vector.load %arg9[%c0_17, %c0_18] : memref<1x64xf32, #tpu.memory_space<vmem>>, vector<1x64xf32>
    %18 = vector.broadcast %16 : vector<16x1xf32> to vector<16x64xf32>
    %19 = vector.broadcast %17 : vector<1x64xf32> to vector<16x64xf32>
    %20 = arith.mulf %18, %19 : vector<16x64xf32>
    %c0_19 = arith.constant 0 : index
    %c0_20 = arith.constant 0 : index
    %21 = vector.load %arg10[%c0_19, %c0_20] : memref<1x64xf32, #tpu.memory_space<vmem>>, vector<1x64xf32>
    %22 = vector.broadcast %21 : vector<1x64xf32> to vector<16x64xf32>
    %23 = arith.addf %20, %22 : vector<16x64xf32>
    %cst_21 = arith.constant 0.000000e+00 : f32
    %24 = vector.broadcast %cst_21 : f32 to vector<16x64xf32>
    %25 = arith.maximumf %23, %24 : vector<16x64xf32>
    %c0_22 = arith.constant 0 : index
    %c0_23 = arith.constant 0 : index
    %26 = vector.load %arg11[%c0_22, %c0_23] : memref<64x64xf32, #tpu.memory_space<vmem>>, vector<64x64xf32>
    %cst_24 = arith.constant dense<0.000000e+00> : vector<16x64xf32>
    %27 = tpu.matmul %25, %26, %cst_24 {dimension_numbers = #tpu.dot_dimension_numbers<[1], [0], [0], [1], [0, 0, 1, 1], [], []>} : vector<16x64xf32>, vector<64x64xf32>, vector<16x64xf32> -> vector<16x64xf32>
    %c0_25 = arith.constant 0 : index
    %c0_26 = arith.constant 0 : index
    %28 = vector.load %arg12[%c0_25, %c0_26] : memref<1x64xf32, #tpu.memory_space<vmem>>, vector<1x64xf32>
    %29 = vector.broadcast %28 : vector<1x64xf32> to vector<16x64xf32>
    %30 = arith.addf %27, %29 : vector<16x64xf32>
    %cst_27 = arith.constant 0.000000e+00 : f32
    %31 = vector.broadcast %cst_27 : f32 to vector<16x64xf32>
    %32 = arith.maximumf %30, %31 : vector<16x64xf32>
    %c0_28 = arith.constant 0 : index
    %c0_29 = arith.constant 0 : index
    %33 = vector.load %arg13[%c0_28, %c0_29] : memref<64x1xf32, #tpu.memory_space<vmem>>, vector<64x1xf32>
    %cst_30 = arith.constant dense<0.000000e+00> : vector<16x1xf32>
    %34 = tpu.matmul %32, %33, %cst_30 {dimension_numbers = #tpu.dot_dimension_numbers<[1], [0], [0], [1], [0, 0, 1, 1], [], []>} : vector<16x64xf32>, vector<64x1xf32>, vector<16x1xf32> -> vector<16x1xf32>
    %c0_31 = arith.constant 0 : index
    %35 = memref.load %arg14[%c0_31] : memref<1xf32, #tpu.memory_space<smem>>
    %36 = vector.broadcast %35 : f32 to vector<16x1xf32>
    %37 = arith.addf %34, %36 : vector<16x1xf32>
    %38 = arith.negf %37 : vector<16x1xf32>
    %39 = math.exp %38 : vector<16x1xf32>
    %cst_32 = arith.constant 1.000000e+00 : f32
    %40 = vector.broadcast %cst_32 : f32 to vector<16x1xf32>
    %41 = arith.addf %40, %39 : vector<16x1xf32>
    %42 = arith.divf %40, %41 : vector<16x1xf32>
    %cst_33 = arith.constant 0.176776692 : f32
    %43 = vector.broadcast %cst_33 : f32 to vector<16x1xf32>
    %44 = arith.mulf %42, %43 : vector<16x1xf32>
    %45 = vector.broadcast %44 : vector<16x1xf32> to vector<16x32xf32>
    %46 = arith.mulf %5, %45 : vector<16x32xf32>
    %47 = vector.shape_cast %46 : vector<16x32xf32> to vector<2x8x32xf32>
    %48 = vector.shape_cast %10 : vector<16x32xf32> to vector<2x8x32xf32>
    %49 = vector.shape_cast %15 : vector<16x32xf32> to vector<2x8x32xf32>
    "tpu.trace_start"() <{level = 10 : i32, message = "bqd,bkd->bqk"}> : () -> ()
    %cst_34 = arith.constant dense<0.000000e+00> : vector<2x8x8xf32>
    %50 = tpu.matmul %47, %48, %cst_34 {dimension_numbers = #tpu.dot_dimension_numbers<[2], [2], [1], [1], [0, 0, 0, 1, 1, 1], [0], [0]>} : vector<2x8x32xf32>, vector<2x8x32xf32>, vector<2x8x8xf32> -> vector<2x8x8xf32>
    "tpu.trace_stop"() : () -> ()
    %cst_35 = arith.constant dense<0xFF800000> : vector<2x8xf32>
    %51 = vector.multi_reduction <maximumf>, %50, %cst_35 [2] : vector<2x8x8xf32> to vector<2x8xf32>
    %52 = vector.shape_cast %51 : vector<2x8xf32> to vector<2x8x1xf32>
    %53 = vector.broadcast %52 : vector<2x8x1xf32> to vector<2x8x8xf32>
    %54 = arith.subf %50, %53 : vector<2x8x8xf32>
    %55 = math.exp %54 : vector<2x8x8xf32>
    %cst_36 = arith.constant dense<0.000000e+00> : vector<2x8xf32>
    %56 = vector.multi_reduction <add>, %55, %cst_36 [2] : vector<2x8x8xf32> to vector<2x8xf32>
    %57 = vector.shape_cast %56 : vector<2x8xf32> to vector<2x8x1xf32>
    "tpu.trace_start"() <{level = 10 : i32, message = "bqk,bkd->bqd"}> : () -> ()
    %cst_37 = arith.constant dense<0.000000e+00> : vector<2x8x32xf32>
    %58 = tpu.matmul %55, %49, %cst_37 {dimension_numbers = #tpu.dot_dimension_numbers<[2], [1], [1], [2], [0, 0, 0, 1, 1, 2], [0], [0]>} : vector<2x8x8xf32>, vector<2x8x32xf32>, vector<2x8x32xf32> -> vector<2x8x32xf32>
    "tpu.trace_stop"() : () -> ()
    %59 = tpu.reciprocal %57 {approx = true} : vector<2x8x1xf32> -> vector<2x8x1xf32>
    %60 = vector.broadcast %59 : vector<2x8x1xf32> to vector<2x8x32xf32>
    %61 = arith.mulf %58, %60 : vector<2x8x32xf32>
    %62 = vector.shape_cast %61 : vector<2x8x32xf32> to vector<16x32xf32>
    %c0_38 = arith.constant 0 : index
    %c0_39 = arith.constant 0 : index
    %63 = vector.load %arg15[%c0_38, %c0_39] : memref<16x32xf32, #tpu.memory_space<vmem>>, vector<16x32xf32>
    tpu.vector_store %arg15[%c0_38, %c0_39], %62 {strides = array<i32>} : memref<16x32xf32, #tpu.memory_space<vmem>>, vector<16x32xf32>,
    return
  }
  func.func @transform_0(%arg0: i32) -> (i32, i32) {
    %c0_i32 = arith.constant 0 : i32
    %c0_i32_0 = arith.constant 0 : i32
    return %arg0, %c0_i32 : i32, i32
  }
  func.func @transform_1(%arg0: i32) -> (i32, i32) {
    %c0_i32 = arith.constant 0 : i32
    %c0_i32_0 = arith.constant 0 : i32
    return %arg0, %c0_i32 : i32, i32
  }
  func.func @transform_2(%arg0: i32) -> (i32, i32) {
    %c0_i32 = arith.constant 0 : i32
    %c0_i32_0 = arith.constant 0 : i32
    %c0_i32_1 = arith.constant 0 : i32
    return %c0_i32, %c0_i32_0 : i32, i32
  }
  func.func @transform_3(%arg0: i32) -> (i32, i32) {
    %c0_i32 = arith.constant 0 : i32
    %c0_i32_0 = arith.constant 0 : i32
    %c0_i32_1 = arith.constant 0 : i32
    return %c0_i32, %c0_i32_0 : i32, i32
  }
  func.func @transform_4(%arg0: i32) -> (i32, i32) {
    %c0_i32 = arith.constant 0 : i32
    %c0_i32_0 = arith.constant 0 : i32
    %c0_i32_1 = arith.constant 0 : i32
    return %c0_i32, %c0_i32_0 : i32, i32
  }
  func.func @transform_5(%arg0: i32) -> (i32, i32) {
    %c0_i32 = arith.constant 0 : i32
    %c0_i32_0 = arith.constant 0 : i32
    %c0_i32_1 = arith.constant 0 : i32
    return %c0_i32, %c0_i32_0 : i32, i32
  }
  func.func @transform_6(%arg0: i32) -> (i32, i32) {
    %c0_i32 = arith.constant 0 : i32
    %c0_i32_0 = arith.constant 0 : i32
    %c0_i32_1 = arith.constant 0 : i32
    return %c0_i32, %c0_i32_0 : i32, i32
  }
  func.func @transform_7(%arg0: i32) -> (i32, i32) {
    %c0_i32 = arith.constant 0 : i32
    %c0_i32_0 = arith.constant 0 : i32
    %c0_i32_1 = arith.constant 0 : i32
    return %c0_i32, %c0_i32_0 : i32, i32
  }
  func.func @transform_8(%arg0: i32) -> (i32, i32) {
    %c0_i32 = arith.constant 0 : i32
    %c0_i32_0 = arith.constant 0 : i32
    %c0_i32_1 = arith.constant 0 : i32
    return %c0_i32, %c0_i32_0 : i32, i32
  }
  func.func @transform_9(%arg0: i32) -> (i32, i32) {
    %c0_i32 = arith.constant 0 : i32
    %c0_i32_0 = arith.constant 0 : i32
    %c0_i32_1 = arith.constant 0 : i32
    return %c0_i32, %c0_i32_0 : i32, i32
  }
  func.func @transform_10(%arg0: i32) -> (i32, i32) {
    %c0_i32 = arith.constant 0 : i32
    %c0_i32_0 = arith.constant 0 : i32
    %c0_i32_1 = arith.constant 0 : i32
    return %c0_i32, %c0_i32_0 : i32, i32
  }
  func.func @transform_11(%arg0: i32) -> (i32, i32) {
    %c0_i32 = arith.constant 0 : i32
    %c0_i32_0 = arith.constant 0 : i32
    %c0_i32_1 = arith.constant 0 : i32
    return %c0_i32, %c0_i32_0 : i32, i32
  }
  func.func @transform_12(%arg0: i32) -> (i32, i32) {
    %c0_i32 = arith.constant 0 : i32
    %c0_i32_0 = arith.constant 0 : i32
    %c0_i32_1 = arith.constant 0 : i32
    return %c0_i32, %c0_i32_0 : i32, i32
  }
  func.func @transform_13(%arg0: i32) -> i32 {
    %c0_i32 = arith.constant 0 : i32
    %c0_i32_0 = arith.constant 0 : i32
    return %c0_i32 : i32
  }
  func.func @transform_14(%arg0: i32) -> (i32, i32) {
    %c0_i32 = arith.constant 0 : i32
    %c0_i32_0 = arith.constant 0 : i32
    return %arg0, %c0_i32 : i32, i32
  }
}

</mosaic_0001>

<llo_original>
// kernel: tpu_custom_call.1
$region0: #{tpu_custom_call.1}
  #allocation0 [shape = 'u32[]', space=smem, size = 0x4, offset = 0x4, fixed_abs, tag = 'smem constant byte address 0x4 - core index']
  #allocation1 [shape = 'u32[144,128]{1,0:T(1,128)}', space=vmem, size = 0x12000, scoped, tag = 'internal scratch']
  #allocation2 [shape = 'f32[1]{0:T(128)S(6)}', space=smem, size = 0x200, scoped, tag = 'scoped memory for tpu_custom_call.1']
  %s0 = inlined_call_operand.vmem [shape: f32[16,32], index: 0, kind: input, shape index: {}]
  %s1 = inlined_call_operand.vmem [shape: f32[16,1], index: 1, kind: input, shape index: {}]
  %s2 = inlined_call_operand.vmem [shape: f32[32,32], index: 2, kind: input, shape index: {}]
  %s3 = inlined_call_operand.vmem [shape: f32[1,32], index: 3, kind: input, shape index: {}]
  %s4 = inlined_call_operand.hbm [shape: f32[32,32], index: 4, kind: input, shape index: {}]
  %s5 = inlined_call_operand.vmem [shape: f32[1,32], index: 5, kind: input, shape index: {}]
  %s6 = inlined_call_operand.hbm [shape: f32[32,32], index: 6, kind: input, shape index: {}]
  %s7 = inlined_call_operand.vmem [shape: f32[1,32], index: 7, kind: input, shape index: {}]
  %s8 = inlined_call_operand.vmem [shape: f32[1,64], index: 8, kind: input, shape index: {}]
  %s9 = inlined_call_operand.vmem [shape: f32[1,64], index: 9, kind: input, shape index: {}]
  %s10 = inlined_call_operand.vmem [shape: f32[64,64], index: 10, kind: input, shape index: {}]
  %s11 = inlined_call_operand.vmem [shape: f32[1,64], index: 11, kind: input, shape index: {}]
  %s12 = inlined_call_operand.vmem [shape: f32[64,1], index: 12, kind: input, shape index: {}]
  %s13 = inlined_call_operand.<no memory space> [shape: f32[1], index: 13, kind: input, shape index: {}]
  %s14 = inlined_call_operand.hbm [shape: f32[16,32], index: 14, kind: output, shape index: {}]
  %s15 = sld [smem:[#allocation0]]
  $region74: #{tpu_custom_call.1} parent=0
    _
  %s17 = ssub.s32 1, %s15
  %s18 = scalar_select 0, %s17, %s15
  %19 = sst [smem:[#allocation2]] %s13
  $region1: #{tpu_custom_call.1} parent=0
    #allocation3 [shape = 'u8[16384]{0}', space=vmem, size = 0x4000, scoped, tag = 'input window, operand 4, single buffered']
    #allocation4 [shape = 's32[1]{0}', space=sflag, size = 0x4, scoped, tag = 'scoped memory for tpu_custom_call.1']
    #allocation5 [shape = 's32[1]{0}', space=sflag, size = 0x4, scoped, tag = 'scoped memory for tpu_custom_call.1']
    #allocation6 [shape = 'u8[16384]{0}', space=vmem, size = 0x4000, scoped, tag = 'input window, operand 6, single buffered']
    #allocation7 [shape = 's32[1]{0}', space=sflag, size = 0x4, scoped, tag = 'scoped memory for tpu_custom_call.1']
    #allocation8 [shape = 'u8[8192]{0}', space=vmem, size = 0x2000, scoped, tag = 'output window, operand 0, single buffered']
    %20 = vsyncpa [#allocation4], 0
    %21 = vsyncpa [#allocation7], 0
    %22 = vsyncpa [#allocation5], 0
    // Predicated region
    $region2: #{tpu_custom_call.1} parent=1 // pred_check
      _
    $region3: #{tpu_custom_call.1} parent=1 // pred_check_branch
      %24 = sbr.rel (0) target = $region5
    $region4: #{tpu_custom_call.1} parent=1 // pred_region
      _
    $region5: #{tpu_custom_call.1} parent=1 // pred_fallthru
      _
    // Predicated region
    $region6: #{tpu_custom_call.1} parent=1 // pred_check
      _
    $region7: #{tpu_custom_call.1} parent=1 // pred_check_branch
      %26 = sbr.rel (0) target = $region9
    $region8: #{tpu_custom_call.1} parent=1 // pred_region
      _
    $region9: #{tpu_custom_call.1} parent=1 // pred_fallthru
      _
    // Predicated region
    $region10: #{tpu_custom_call.1} parent=1 // pred_check
      _
    $region11: #{tpu_custom_call.1} parent=1 // pred_check_branch
      %28 = sbr.rel (0) target = $region13
    $region12: #{tpu_custom_call.1} parent=1 // pred_region
      _
    $region13: #{tpu_custom_call.1} parent=1 // pred_fallthru
      _
    // Predicated region
    $region14: #{tpu_custom_call.1} parent=1 // pred_check
      _
    $region15: #{tpu_custom_call.1} parent=1 // pred_check_branch
      %30 = sbr.rel (0) target = $region17
    $region16: #{tpu_custom_call.1} parent=1 // pred_region
      _
    $region17: #{tpu_custom_call.1} parent=1 // pred_fallthru
      _
    // Predicated region
    $region18: #{tpu_custom_call.1} parent=1 // pred_check
      _
    $region19: #{tpu_custom_call.1} parent=1 // pred_check_branch
      %32 = sbr.rel (0) target = $region21
    $region20: #{tpu_custom_call.1} parent=1 // pred_region
      %s34 = ssub.s32 512, 512
      %35 = vsyncadd [#allocation4], %s34
      %s36 = sshll.u32 [#allocation3], 4
      %s37 = int_to_ptr.vmem [resolvable:$true] %s36
      %42 = dma.hbm_to_vmem [thread:$0]  %s4, 512, %s37, [#allocation4], 128, 128, 8
    $region21: #{tpu_custom_call.1} parent=1 // pred_fallthru
      _
    // Predicated region
    $region22: #{tpu_custom_call.1} parent=1 // pred_check
      _
    $region23: #{tpu_custom_call.1} parent=1 // pred_check_branch
      %44 = sbr.rel (0) target = $region25
    $region24: #{tpu_custom_call.1} parent=1 // pred_region
      _
    $region25: #{tpu_custom_call.1} parent=1 // pred_fallthru
      _
    // Predicated region
    $region26: #{tpu_custom_call.1} parent=1 // pred_check
      _
    $region27: #{tpu_custom_call.1} parent=1 // pred_check_branch
      %46 = sbr.rel (0) target = $region29
    $region28: #{tpu_custom_call.1} parent=1 // pred_region
      %s48 = ssub.s32 512, 512
      %49 = vsyncadd [#allocation7], %s48
      %s50 = sshll.u32 [#allocation6], 4
      %s51 = int_to_ptr.vmem [resolvable:$true] %s50
      %56 = dma.hbm_to_vmem [thread:$0]  %s6, 512, %s51, [#allocation7], 128, 128, 8
    $region29: #{tpu_custom_call.1} parent=1 // pred_fallthru
      _
    // Predicated region
    $region30: #{tpu_custom_call.1} parent=1 // pred_check
      _
    $region31: #{tpu_custom_call.1} parent=1 // pred_check_branch
      %58 = sbr.rel (0) target = $region33
    $region32: #{tpu_custom_call.1} parent=1 // pred_region
      _
    $region33: #{tpu_custom_call.1} parent=1 // pred_fallthru
      _
    // Predicated region
    $region34: #{tpu_custom_call.1} parent=1 // pred_check
      _
    $region35: #{tpu_custom_call.1} parent=1 // pred_check_branch
      %60 = sbr.rel (0) target = $region37
    $region36: #{tpu_custom_call.1} parent=1 // pred_region
      _
    $region37: #{tpu_custom_call.1} parent=1 // pred_fallthru
      _
    // Predicated region
    $region38: #{tpu_custom_call.1} parent=1 // pred_check
      _
    $region39: #{tpu_custom_call.1} parent=1 // pred_check_branch
      %62 = sbr.rel (0) target = $region41
    $region40: #{tpu_custom_call.1} parent=1 // pred_region
      _
    $region41: #{tpu_custom_call.1} parent=1 // pred_fallthru
      _
    // Predicated region
    $region42: #{tpu_custom_call.1} parent=1 // pred_check
      _
    $region43: #{tpu_custom_call.1} parent=1 // pred_check_branch
      %64 = sbr.rel (0) target = $region45
    $region44: #{tpu_custom_call.1} parent=1 // pred_region
      _
    $region45: #{tpu_custom_call.1} parent=1 // pred_fallthru
      _
    // Predicated region
    $region46: #{tpu_custom_call.1} parent=1 // pred_check
      _
    $region47: #{tpu_custom_call.1} parent=1 // pred_check_branch
      %66 = sbr.rel (0) target = $region49
    $region48: #{tpu_custom_call.1} parent=1 // pred_region
      _
    $region49: #{tpu_custom_call.1} parent=1 // pred_fallthru
      _
    // Predicated region
    $region50: #{tpu_custom_call.1} parent=1 // pred_check
      _
    $region51: #{tpu_custom_call.1} parent=1 // pred_check_branch
      %68 = sbr.rel (0) target = $region53
    $region52: #{tpu_custom_call.1} parent=1 // pred_region
      _
    $region53: #{tpu_custom_call.1} parent=1 // pred_fallthru
      _
    // Predicated region
    $region54: #{tpu_custom_call.1} parent=1 // pred_check
      _
    $region55: #{tpu_custom_call.1} parent=1 // pred_check_branch
      %70 = sbr.rel (0) target = $region57
    $region56: #{tpu_custom_call.1} parent=1 // pred_region
      _
    $region57: #{tpu_custom_call.1} parent=1 // pred_fallthru
      _
    // Predicated region
    $region58: #{tpu_custom_call.1} parent=1 // pred_check
      _
    $region59: #{tpu_custom_call.1} parent=1 // pred_check_branch
      %72 = sbr.rel (0) target = $region61
    $region60: #{tpu_custom_call.1} parent=1 // pred_region
      %73 = dma.done [#allocation4], 512
    $region61: #{tpu_custom_call.1} parent=1 // pred_fallthru
      _
    // Predicated region
    $region62: #{tpu_custom_call.1} parent=1 // pred_check
      _
    $region63: #{tpu_custom_call.1} parent=1 // pred_check_branch
      %75 = sbr.rel (0) target = $region65
    $region64: #{tpu_custom_call.1} parent=1 // pred_region
      %76 = dma.done [#allocation7], 512
    $region65: #{tpu_custom_call.1} parent=1 // pred_fallthru
      _
    %v77 = vld [vmem:[%s0] sm:$0xff]
    %v78 = vld [vmem:[%s0 + $0x8] sm:$0xff]
    %v79 = vld [vmem:[%s2] sm:$0xff]
    %v80 = vld [vmem:[%s2 + $0x8] sm:$0xff]
    %v81 = vld [vmem:[%s2 + $0x10] sm:$0xff]
    %v82 = vld [vmem:[%s2 + $0x18] sm:$0xff]
    %v83 = vld [vmem:[%s3] sm:$0x1]
    %v85 = vlaneseq
    %v86 = vshrl.u32 %v85, 7
    %v87 = vsub.s32 0, %v86
    %v88 = vrot.slane %v83, %v87
    %vm90 = vcmask 261120
    %v92 = vsel %vm90, %v77, 0
    %v95 = vsel %vm90, %v78, 0
    %97 = vmatprep.subr.mxu0 0.0
    %98 = vmatpush1.msra.mxu0 %v79
    %99 = vmatprep.subr.mxu0 0.0
    %100 = vmatpush1.msra.mxu0 %v80
    %101 = vmatprep.subr.mxu0 0.0
    %102 = vmatpush1.msra.mxu0 %v81
    %103 = vmatprep.subr.mxu0 0.0
    %104 = vmatpush1.msra.mxu0 %v82
    %105 = vmatprep.subr.mxu0 0.0
    %106 = vmatpush1.msra.mxu0 0.0
    %107 = vmatprep.subr.mxu0 0.0
    %108 = vmatpush1.msra.mxu0 0.0
    %109 = vmatprep.subr.mxu0 0.0
    %110 = vmatpush1.msra.mxu0 0.0
    %111 = vmatprep.subr.mxu0 0.0
    %112 = vmatpush1.msra.mxu0 0.0
    %113 = vmatprep.subr.mxu0 0.0
    %114 = vmatpush1.msra.mxu0 0.0
    %115 = vmatprep.subr.mxu0 0.0
    %116 = vmatpush1.msra.mxu0 0.0
    %117 = vmatprep.subr.mxu0 0.0
    %118 = vmatpush1.msra.mxu0 0.0
    %119 = vmatprep.subr.mxu0 0.0
    %120 = vmatpush1.msra.mxu0 0.0
    %121 = vmatprep.subr.mxu0 0.0
    %122 = vmatpush1.msra.mxu0 0.0
    %123 = vmatprep.subr.mxu0 0.0
    %124 = vmatpush1.msra.mxu0 0.0
    %125 = vmatprep.subr.mxu0 0.0
    %126 = vmatpush1.msra.mxu0 0.0
    %127 = vmatprep.subr.mxu0 0.0
    %128 = vmatpush1.msra.mxu0 0.0
    %129 = vmatprep.subr.mxu0 0.0
    %130 = vmatpush1.msra.mxu0 0.0
    %131 = vmatprep.subr.mxu0 0.0
    %132 = vmatpush1.msra.mxu0 0.0
    %133 = vmatprep.subr.mxu0 0.0
    %134 = vmatpush1.msra.mxu0 0.0
    %135 = vmatprep.subr.mxu0 0.0
    %136 = vmatpush1.msra.mxu0 0.0
    %137 = vmatprep.subr.mxu0 0.0
    %138 = vmatpush1.msra.mxu0 0.0
    %139 = vmatprep.subr.mxu0 0.0
    %140 = vmatpush1.msra.mxu0 0.0
    %141 = vmatprep.subr.mxu0 0.0
    %142 = vmatpush1.msra.mxu0 0.0
    %143 = vmatprep.subr.mxu0 0.0
    %144 = vmatpush1.msra.mxu0 0.0
    %145 = vmatprep.subr.mxu0 0.0
    %146 = vmatpush1.msra.mxu0 0.0
    %147 = vmatprep.subr.mxu0 0.0
    %148 = vmatpush1.msra.mxu0 0.0
    %149 = vmatprep.subr.mxu0 0.0
    %150 = vmatpush1.msra.mxu0 0.0
    %151 = vmatprep.subr.mxu0 0.0
    %152 = vmatpush1.msra.mxu0 0.0
    %153 = vmatprep.subr.mxu0 0.0
    %154 = vmatpush1.msra.mxu0 0.0
    %155 = vmatprep.subr.mxu0 0.0
    %156 = vmatpush1.msra.mxu0 0.0
    %157 = vmatprep.subr.mxu0 0.0
    %158 = vmatpush1.msra.mxu0 0.0
    %159 = vmatprep.subr.mxu0 0.0
    %160 = vmatpush1.msra.mxu0 0.0
    %161 = vmatprep.mubr.f32.mxu0 0.0
    %162 = vmatmul.mubr.f32.gmra.mrb[0].mxu0 %v92
    %v163 = vpop.f32.mrb[0].mxu0
    %v164 = vadd.f32 %v88, %v163
    %v165 = vpop.f32.mrb[0].mxu0
    %166 = vmatprep.mubr.f32.mxu0 0.0
    %167 = vmatmul.mubr.f32.gmra.mrb[0].mxu0 %v95
    %v168 = vpop.f32.mrb[0].mxu0
    %v169 = vadd.f32 %v88, %v168
    %v170 = vpop.f32.mrb[0].mxu0
    %171 = vdwg.mxu0
    %v172 = vld [vmem:[#allocation3] sm:$0xff]
    %v173 = vld [vmem:[#allocation3 + $0x8] sm:$0xff]
    %v174 = vld [vmem:[#allocation3 + $0x10] sm:$0xff]
    %v175 = vld [vmem:[#allocation3 + $0x18] sm:$0xff]
    %v176 = vld [vmem:[%s5] sm:$0x1]
    %v178 = vlaneseq
    %v179 = vshrl.u32 %v178, 7
    %v180 = vsub.s32 0, %v179
    %v181 = vrot.slane %v176, %v180
    %183 = vmatprep.subr.mxu0 0.0
    %184 = vmatpush1.msra.mxu0 %v172
    %185 = vmatprep.subr.mxu0 0.0
    %186 = vmatpush1.msra.mxu0 %v173
    %187 = vmatprep.subr.mxu0 0.0
    %188 = vmatpush1.msra.mxu0 %v174
    %189 = vmatprep.subr.mxu0 0.0
    %190 = vmatpush1.msra.mxu0 %v175
    %191 = vmatprep.subr.mxu0 0.0
    %192 = vmatpush1.msra.mxu0 0.0
    %193 = vmatprep.subr.mxu0 0.0
    %194 = vmatpush1.msra.mxu0 0.0
    %195 = vmatprep.subr.mxu0 0.0
    %196 = vmatpush1.msra.mxu0 0.0
    %197 = vmatprep.subr.mxu0 0.0
    %198 = vmatpush1.msra.mxu0 0.0
    %199 = vmatprep.subr.mxu0 0.0
    %200 = vmatpush1.msra.mxu0 0.0
    %201 = vmatprep.subr.mxu0 0.0
    %202 = vmatpush1.msra.mxu0 0.0
    %203 = vmatprep.subr.mxu0 0.0
    %204 = vmatpush1.msra.mxu0 0.0
    %205 = vmatprep.subr.mxu0 0.0
    %206 = vmatpush1.msra.mxu0 0.0
    %207 = vmatprep.subr.mxu0 0.0
    %208 = vmatpush1.msra.mxu0 0.0
    %209 = vmatprep.subr.mxu0 0.0
    %210 = vmatpush1.msra.mxu0 0.0
    %211 = vmatprep.subr.mxu0 0.0
    %212 = vmatpush1.msra.mxu0 0.0
    %213 = vmatprep.subr.mxu0 0.0
    %214 = vmatpush1.msra.mxu0 0.0
    %215 = vmatprep.subr.mxu0 0.0
    %216 = vmatpush1.msra.mxu0 0.0
    %217 = vmatprep.subr.mxu0 0.0
    %218 = vmatpush1.msra.mxu0 0.0
    %219 = vmatprep.subr.mxu0 0.0
    %220 = vmatpush1.msra.mxu0 0.0
    %221 = vmatprep.subr.mxu0 0.0
    %222 = vmatpush1.msra.mxu0 0.0
    %223 = vmatprep.subr.mxu0 0.0
    %224 = vmatpush1.msra.mxu0 0.0
    %225 = vmatprep.subr.mxu0 0.0
    %226 = vmatpush1.msra.mxu0 0.0
    %227 = vmatprep.subr.mxu0 0.0
    %228 = vmatpush1.msra.mxu0 0.0
    %229 = vmatprep.subr.mxu0 0.0
    %230 = vmatpush1.msra.mxu0 0.0
    %231 = vmatprep.subr.mxu0 0.0
    %232 = vmatpush1.msra.mxu0 0.0
    %233 = vmatprep.subr.mxu0 0.0
    %234 = vmatpush1.msra.mxu0 0.0
    %235 = vmatprep.subr.mxu0 0.0
    %236 = vmatpush1.msra.mxu0 0.0
    %237 = vmatprep.subr.mxu0 0.0
    %238 = vmatpush1.msra.mxu0 0.0
    %239 = vmatprep.subr.mxu0 0.0
    %240 = vmatpush1.msra.mxu0 0.0
    %241 = vmatprep.subr.mxu0 0.0
    %242 = vmatpush1.msra.mxu0 0.0
    %243 = vmatprep.subr.mxu0 0.0
    %244 = vmatpush1.msra.mxu0 0.0
    %245 = vmatprep.subr.mxu0 0.0
    %246 = vmatpush1.msra.mxu0 0.0
    %247 = vmatprep.mubr.f32.mxu0 0.0
    %248 = vmatmul.mubr.f32.gmra.mrb[0].mxu0 %v92
    %v249 = vpop.f32.mrb[0].mxu0
    %v250 = vadd.f32 %v181, %v249
    %v251 = vpop.f32.mrb[0].mxu0
    %252 = vmatprep.mubr.f32.mxu0 0.0
    %253 = vmatmul.mubr.f32.gmra.mrb[0].mxu0 %v95
    %v254 = vpop.f32.mrb[0].mxu0
    %v255 = vadd.f32 %v181, %v254
    %v256 = vpop.f32.mrb[0].mxu0
    %257 = vdwg.mxu0
    %v258 = vld [vmem:[#allocation6] sm:$0xff]
    %v259 = vld [vmem:[#allocation6 + $0x8] sm:$0xff]
    %v260 = vld [vmem:[#allocation6 + $0x10] sm:$0xff]
    %v261 = vld [vmem:[#allocation6 + $0x18] sm:$0xff]
    %v262 = vld [vmem:[%s7] sm:$0x1]
    %v264 = vlaneseq
    %v265 = vshrl.u32 %v264, 7
    %v266 = vsub.s32 0, %v265
    %v267 = vrot.slane %v262, %v266
    %269 = vmatprep.subr.mxu0 0.0
    %270 = vmatpush1.msra.mxu0 %v258
    %271 = vmatprep.subr.mxu0 0.0
    %272 = vmatpush1.msra.mxu0 %v259
    %273 = vmatprep.subr.mxu0 0.0
    %274 = vmatpush1.msra.mxu0 %v260
    %275 = vmatprep.subr.mxu0 0.0
    %276 = vmatpush1.msra.mxu0 %v261
    %277 = vmatprep.subr.mxu0 0.0
    %278 = vmatpush1.msra.mxu0 0.0
    %279 = vmatprep.subr.mxu0 0.0
    %280 = vmatpush1.msra.mxu0 0.0
    %281 = vmatprep.subr.mxu0 0.0
    %282 = vmatpush1.msra.mxu0 0.0
    %283 = vmatprep.subr.mxu0 0.0
    %284 = vmatpush1.msra.mxu0 0.0
    %285 = vmatprep.subr.mxu0 0.0
    %286 = vmatpush1.msra.mxu0 0.0
    %287 = vmatprep.subr.mxu0 0.0
    %288 = vmatpush1.msra.mxu0 0.0
    %289 = vmatprep.subr.mxu0 0.0
    %290 = vmatpush1.msra.mxu0 0.0
    %291 = vmatprep.subr.mxu0 0.0
    %292 = vmatpush1.msra.mxu0 0.0
    %293 = vmatprep.subr.mxu0 0.0
    %294 = vmatpush1.msra.mxu0 0.0
    %295 = vmatprep.subr.mxu0 0.0
    %296 = vmatpush1.msra.mxu0 0.0
    %297 = vmatprep.subr.mxu0 0.0
    %298 = vmatpush1.msra.mxu0 0.0
    %299 = vmatprep.subr.mxu0 0.0
    %300 = vmatpush1.msra.mxu0 0.0
    %301 = vmatprep.subr.mxu0 0.0
    %302 = vmatpush1.msra.mxu0 0.0
    %303 = vmatprep.subr.mxu0 0.0
    %304 = vmatpush1.msra.mxu0 0.0
    %305 = vmatprep.subr.mxu0 0.0
    %306 = vmatpush1.msra.mxu0 0.0
    %307 = vmatprep.subr.mxu0 0.0
    %308 = vmatpush1.msra.mxu0 0.0
    %309 = vmatprep.subr.mxu0 0.0
    %310 = vmatpush1.msra.mxu0 0.0
    %311 = vmatprep.subr.mxu0 0.0
    %312 = vmatpush1.msra.mxu0 0.0
    %313 = vmatprep.subr.mxu0 0.0
    %314 = vmatpush1.msra.mxu0 0.0
    %315 = vmatprep.subr.mxu0 0.0
    %316 = vmatpush1.msra.mxu0 0.0
    %317 = vmatprep.subr.mxu0 0.0
    %318 = vmatpush1.msra.mxu0 0.0
    %319 = vmatprep.subr.mxu0 0.0
    %320 = vmatpush1.msra.mxu0 0.0
    %321 = vmatprep.subr.mxu0 0.0
    %322 = vmatpush1.msra.mxu0 0.0
    %323 = vmatprep.subr.mxu0 0.0
    %324 = vmatpush1.msra.mxu0 0.0
    %325 = vmatprep.subr.mxu0 0.0
    %326 = vmatpush1.msra.mxu0 0.0
    %327 = vmatprep.subr.mxu0 0.0
    %328 = vmatpush1.msra.mxu0 0.0
    %329 = vmatprep.subr.mxu0 0.0
    %330 = vmatpush1.msra.mxu0 0.0
    %331 = vmatprep.subr.mxu0 0.0
    %332 = vmatpush1.msra.mxu0 0.0
    %333 = vmatprep.mubr.f32.mxu0 0.0
    %334 = vmatmul.mubr.f32.gmra.mrb[0].mxu0 %v92
    %v335 = vpop.f32.mrb[0].mxu0
    %v336 = vadd.f32 %v267, %v335
    %v337 = vpop.f32.mrb[0].mxu0
    %338 = vmatprep.mubr.f32.mxu0 0.0
    %339 = vmatmul.mubr.f32.gmra.mrb[0].mxu0 %v95
    %v340 = vpop.f32.mrb[0].mxu0
    %v341 = vadd.f32 %v267, %v340
    %v342 = vpop.f32.mrb[0].mxu0
    %343 = vdwg.mxu0
    %v344 = vld [vmem:[%s1] sm:$0xff]
    %v345 = vld [vmem:[%s1 + $0x8] sm:$0xff]
    %v346 = vld [vmem:[%s8] sm:$0x1]
    %348 = vset.pattern.permute.xlu0 0
    %349 = vperm.xlu0 %348, %v344
    %v350 = vpop.permute.xlu0 %349
    %353 = vset.pattern.permute.xlu0 0
    %354 = vperm.xlu0 %353, %v345
    %v355 = vpop.permute.xlu0 %354
    %v358 = vlaneseq
    %v359 = vshrl.u32 %v358, 7
    %v360 = vsub.s32 0, %v359
    %v361 = vrot.slane %v346, %v360
    %v363 = vmul.f32 %v350, %v361
    %v364 = vmul.f32 %v355, %v361
    %v365 = vld [vmem:[%s9] sm:$0x1]
    %v367 = vlaneseq
    %v368 = vshrl.u32 %v367, 7
    %v369 = vsub.s32 0, %v368
    %v370 = vrot.slane %v365, %v369
    %v372 = vadd.f32 %v363, %v370
    %v373 = vadd.f32 %v364, %v370
    %v374 = vmax.f32 %v372, 0.0
    %v375 = vmax.f32 %v373, 0.0
    %v376 = vld [vmem:[%s10] sm:$0xff]
    %v377 = vld [vmem:[%s10 + $0x8] sm:$0xff]
    %v378 = vld [vmem:[%s10 + $0x10] sm:$0xff]
    %v379 = vld [vmem:[%s10 + $0x18] sm:$0xff]
    %v380 = vld [vmem:[%s10 + $0x20] sm:$0xff]
    %v381 = vld [vmem:[%s10 + $0x28] sm:$0xff]
    %v382 = vld [vmem:[%s10 + $0x30] sm:$0xff]
    %v383 = vld [vmem:[%s10 + $0x38] sm:$0xff]
    %v384 = vld [vmem:[%s11] sm:$0x1]
    %v386 = vlaneseq
    %v387 = vshrl.u32 %v386, 7
    %v388 = vsub.s32 0, %v387
    %v389 = vrot.slane %v384, %v388
    %vm391 = vcmask 523264
    %v393 = vsel %vm391, %v374, 0
    %v396 = vsel %vm391, %v375, 0
    %398 = vmatprep.subr.mxu0 0.0
    %399 = vmatpush1.msra.mxu0 %v376
    %400 = vmatprep.subr.mxu0 0.0
    %401 = vmatpush1.msra.mxu0 %v377
    %402 = vmatprep.subr.mxu0 0.0
    %403 = vmatpush1.msra.mxu0 %v378
    %404 = vmatprep.subr.mxu0 0.0
    %405 = vmatpush1.msra.mxu0 %v379
    %406 = vmatprep.subr.mxu0 0.0
    %407 = vmatpush1.msra.mxu0 %v380
    %408 = vmatprep.subr.mxu0 0.0
    %409 = vmatpush1.msra.mxu0 %v381
    %410 = vmatprep.subr.mxu0 0.0
    %411 = vmatpush1.msra.mxu0 %v382
    %412 = vmatprep.subr.mxu0 0.0
    %413 = vmatpush1.msra.mxu0 %v383
    %414 = vmatprep.subr.mxu0 0.0
    %415 = vmatpush1.msra.mxu0 0.0
    %416 = vmatprep.subr.mxu0 0.0
    %417 = vmatpush1.msra.mxu0 0.0
    %418 = vmatprep.subr.mxu0 0.0
    %419 = vmatpush1.msra.mxu0 0.0
    %420 = vmatprep.subr.mxu0 0.0
    %421 = vmatpush1.msra.mxu0 0.0
    %422 = vmatprep.subr.mxu0 0.0
    %423 = vmatpush1.msra.mxu0 0.0
    %424 = vmatprep.subr.mxu0 0.0
    %425 = vmatpush1.msra.mxu0 0.0
    %426 = vmatprep.subr.mxu0 0.0
    %427 = vmatpush1.msra.mxu0 0.0
    %428 = vmatprep.subr.mxu0 0.0
    %429 = vmatpush1.msra.mxu0 0.0
    %430 = vmatprep.subr.mxu0 0.0
    %431 = vmatpush1.msra.mxu0 0.0
    %432 = vmatprep.subr.mxu0 0.0
    %433 = vmatpush1.msra.mxu0 0.0
    %434 = vmatprep.subr.mxu0 0.0
    %435 = vmatpush1.msra.mxu0 0.0
    %436 = vmatprep.subr.mxu0 0.0
    %437 = vmatpush1.msra.mxu0 0.0
    %438 = vmatprep.subr.mxu0 0.0
    %439 = vmatpush1.msra.mxu0 0.0
    %440 = vmatprep.subr.mxu0 0.0
    %441 = vmatpush1.msra.mxu0 0.0
    %442 = vmatprep.subr.mxu0 0.0
    %443 = vmatpush1.msra.mxu0 0.0
    %444 = vmatprep.subr.mxu0 0.0
    %445 = vmatpush1.msra.mxu0 0.0
    %446 = vmatprep.subr.mxu0 0.0
    %447 = vmatpush1.msra.mxu0 0.0
    %448 = vmatprep.subr.mxu0 0.0
    %449 = vmatpush1.msra.mxu0 0.0
    %450 = vmatprep.subr.mxu0 0.0
    %451 = vmatpush1.msra.mxu0 0.0
    %452 = vmatprep.subr.mxu0 0.0
    %453 = vmatpush1.msra.mxu0 0.0
    %454 = vmatprep.subr.mxu0 0.0
    %455 = vmatpush1.msra.mxu0 0.0
    %456 = vmatprep.subr.mxu0 0.0
    %457 = vmatpush1.msra.mxu0 0.0
    %458 = vmatprep.subr.mxu0 0.0
    %459 = vmatpush1.msra.mxu0 0.0
    %460 = vmatprep.subr.mxu0 0.0
    %461 = vmatpush1.msra.mxu0 0.0
    %462 = vmatprep.mubr.f32.mxu0 0.0
    %463 = vmatmul.mubr.f32.gmra.mrb[0].mxu0 %v393
    %v464 = vpop.f32.mrb[0].mxu0
    %v465 = vadd.f32 %v389, %v464
    %v466 = vpop.f32.mrb[0].mxu0
    %467 = vmatprep.mubr.f32.mxu0 0.0
    %468 = vmatmul.mubr.f32.gmra.mrb[0].mxu0 %v396
    %v469 = vpop.f32.mrb[0].mxu0
    %v470 = vadd.f32 %v389, %v469
    %v471 = vpop.f32.mrb[0].mxu0
    %472 = vdwg.mxu0
    %v473 = vmax.f32 %v465, 0.0
    %v474 = vmax.f32 %v470, 0.0
    %v475 = vld [vmem:[%s12] sm:$0xff]
    %v476 = vld [vmem:[%s12 + $0x8] sm:$0xff]
    %v477 = vld [vmem:[%s12 + $0x10] sm:$0xff]
    %v478 = vld [vmem:[%s12 + $0x18] sm:$0xff]
    %v479 = vld [vmem:[%s12 + $0x20] sm:$0xff]
    %v480 = vld [vmem:[%s12 + $0x28] sm:$0xff]
    %v481 = vld [vmem:[%s12 + $0x30] sm:$0xff]
    %v482 = vld [vmem:[%s12 + $0x38] sm:$0xff]
    %s483 = sld [smem:[#allocation2]]
    %v484 = vstv %s483
    %v486 = vsel %vm391, %v473, 0
    %v489 = vsel %vm391, %v474, 0
    %491 = vmatprep.subr.mxu0 0.0
    %492 = vmatpush1.msra.mxu0 %v475
    %493 = vmatprep.subr.mxu0 0.0
    %494 = vmatpush1.msra.mxu0 %v476
    %495 = vmatprep.subr.mxu0 0.0
    %496 = vmatpush1.msra.mxu0 %v477
    %497 = vmatprep.subr.mxu0 0.0
    %498 = vmatpush1.msra.mxu0 %v478
    %499 = vmatprep.subr.mxu0 0.0
    %500 = vmatpush1.msra.mxu0 %v479
    %501 = vmatprep.subr.mxu0 0.0
    %502 = vmatpush1.msra.mxu0 %v480
    %503 = vmatprep.subr.mxu0 0.0
    %504 = vmatpush1.msra.mxu0 %v481
    %505 = vmatprep.subr.mxu0 0.0
    %506 = vmatpush1.msra.mxu0 %v482
    %507 = vmatprep.subr.mxu0 0.0
    %508 = vmatpush1.msra.mxu0 0.0
    %509 = vmatprep.subr.mxu0 0.0
    %510 = vmatpush1.msra.mxu0 0.0
    %511 = vmatprep.subr.mxu0 0.0
    %512 = vmatpush1.msra.mxu0 0.0
    %513 = vmatprep.subr.mxu0 0.0
    %514 = vmatpush1.msra.mxu0 0.0
    %515 = vmatprep.subr.mxu0 0.0
    %516 = vmatpush1.msra.mxu0 0.0
    %517 = vmatprep.subr.mxu0 0.0
    %518 = vmatpush1.msra.mxu0 0.0
    %519 = vmatprep.subr.mxu0 0.0
    %520 = vmatpush1.msra.mxu0 0.0
    %521 = vmatprep.subr.mxu0 0.0
    %522 = vmatpush1.msra.mxu0 0.0
    %523 = vmatprep.subr.mxu0 0.0
    %524 = vmatpush1.msra.mxu0 0.0
    %525 = vmatprep.subr.mxu0 0.0
    %526 = vmatpush1.msra.mxu0 0.0
    %527 = vmatprep.subr.mxu0 0.0
    %528 = vmatpush1.msra.mxu0 0.0
    %529 = vmatprep.subr.mxu0 0.0
    %530 = vmatpush1.msra.mxu0 0.0
    %531 = vmatprep.subr.mxu0 0.0
    %532 = vmatpush1.msra.mxu0 0.0
    %533 = vmatprep.subr.mxu0 0.0
    %534 = vmatpush1.msra.mxu0 0.0
    %535 = vmatprep.subr.mxu0 0.0
    %536 = vmatpush1.msra.mxu0 0.0
    %537 = vmatprep.subr.mxu0 0.0
    %538 = vmatpush1.msra.mxu0 0.0
    %539 = vmatprep.subr.mxu0 0.0
    %540 = vmatpush1.msra.mxu0 0.0
    %541 = vmatprep.subr.mxu0 0.0
    %542 = vmatpush1.msra.mxu0 0.0
    %543 = vmatprep.subr.mxu0 0.0
    %544 = vmatpush1.msra.mxu0 0.0
    %545 = vmatprep.subr.mxu0 0.0
    %546 = vmatpush1.msra.mxu0 0.0
    %547 = vmatprep.subr.mxu0 0.0
    %548 = vmatpush1.msra.mxu0 0.0
    %549 = vmatprep.subr.mxu0 0.0
    %550 = vmatpush1.msra.mxu0 0.0
    %551 = vmatprep.subr.mxu0 0.0
    %552 = vmatpush1.msra.mxu0 0.0
    %553 = vmatprep.subr.mxu0 0.0
    %554 = vmatpush1.msra.mxu0 0.0
    %555 = vmatprep.mubr.f32.mxu0 0.0
    %556 = vmatmul.mubr.f32.gmra.mrb[0].mxu0 %v486
    %v557 = vpop.f32.mrb[0].mxu0
    %v558 = vadd.f32 %v484, %v557
    %v559 = vpop.f32.mrb[0].mxu0
    %560 = vmatprep.mubr.f32.mxu0 0.0
    %561 = vmatmul.mubr.f32.gmra.mrb[0].mxu0 %v489
    %v562 = vpop.f32.mrb[0].mxu0
    %v563 = vadd.f32 %v484, %v562
    %v564 = vpop.f32.mrb[0].mxu0
    %565 = vdwg.mxu0
    %v566 = vxor.u32 %v558, 2147483648
    %v567 = vxor.u32 %v563, 2147483648
    %v568 = vmul.f32 %v566, 1.442695
    %v569 = vpow.pop %v568
    %v570 = vmul.f32 %v567, 1.442695
    %v571 = vpow.pop %v570
    %v572 = vadd.f32 %v569, 1.0
    %v573 = vadd.f32 %v571, 1.0
    %v574 = vrcp.pop %v572
    %v575 = vmul.f32 1.0, %v574
    %v576 = vrcp.pop %v573
    %v577 = vmul.f32 1.0, %v576
    %v578 = vmul.f32 %v575, 0.17677669
    %v579 = vmul.f32 %v577, 0.17677669
    %581 = vset.pattern.permute.xlu0 0
    %582 = vperm.xlu0 %581, %v578
    %v583 = vpop.permute.xlu0 %582
    %586 = vset.pattern.permute.xlu0 0
    %587 = vperm.xlu0 %586, %v579
    %v588 = vpop.permute.xlu0 %587
    %v590 = vmul.f32 %v164, %v583
    %v591 = vmul.f32 %v169, %v588
    %v593 = vsel %vm90, %v590, 0
    %v596 = vsel %vm90, %v250, 0
    %598 = vmatprep.subr.mxu0 0.0
    %599 = vmatpush1.xpose.msra.mxu0 %v596
    %600 = vmatprep.subr.mxu0 0.0
    %601 = vmatpush1.xpose.msra.mxu0 0.0
    %602 = vmatprep.subr.mxu0 0.0
    %603 = vmatpush1.xpose.msra.mxu0 0.0
    %604 = vmatprep.subr.mxu0 0.0
    %605 = vmatpush1.xpose.msra.mxu0 0.0
    %606 = vmatprep.subr.mxu0 0.0
    %607 = vmatpush1.xpose.msra.mxu0 0.0
    %608 = vmatprep.subr.mxu0 0.0
    %609 = vmatpush1.xpose.msra.mxu0 0.0
    %610 = vmatprep.subr.mxu0 0.0
    %611 = vmatpush1.xpose.msra.mxu0 0.0
    %612 = vmatprep.subr.mxu0 0.0
    %613 = vmatpush1.xpose.msra.mxu0 0.0
    %614 = vmatprep.subr.mxu0 0.0
    %615 = vmatpush1.xpose.msra.mxu0 0.0
    %616 = vmatprep.subr.mxu0 0.0
    %617 = vmatpush1.xpose.msra.mxu0 0.0
    %618 = vmatprep.subr.mxu0 0.0
    %619 = vmatpush1.xpose.msra.mxu0 0.0
    %620 = vmatprep.subr.mxu0 0.0
    %621 = vmatpush1.xpose.msra.mxu0 0.0
    %622 = vmatprep.subr.mxu0 0.0
    %623 = vmatpush1.xpose.msra.mxu0 0.0
    %624 = vmatprep.subr.mxu0 0.0
    %625 = vmatpush1.xpose.msra.mxu0 0.0
    %626 = vmatprep.subr.mxu0 0.0
    %627 = vmatpush1.xpose.msra.mxu0 0.0
    %628 = vmatprep.subr.mxu0 0.0
    %629 = vmatpush1.xpose.msra.mxu0 0.0
    %630 = vmatprep.subr.mxu0 0.0
    %631 = vmatpush1.xpose.msra.mxu0 0.0
    %632 = vmatprep.subr.mxu0 0.0
    %633 = vmatpush1.xpose.msra.mxu0 0.0
    %634 = vmatprep.subr.mxu0 0.0
    %635 = vmatpush1.xpose.msra.mxu0 0.0
    %636 = vmatprep.subr.mxu0 0.0
    %637 = vmatpush1.xpose.msra.mxu0 0.0
    %638 = vmatprep.subr.mxu0 0.0
    %639 = vmatpush1.xpose.msra.mxu0 0.0
    %640 = vmatprep.subr.mxu0 0.0
    %641 = vmatpush1.xpose.msra.mxu0 0.0
    %642 = vmatprep.subr.mxu0 0.0
    %643 = vmatpush1.xpose.msra.mxu0 0.0
    %644 = vmatprep.subr.mxu0 0.0
    %645 = vmatpush1.xpose.msra.mxu0 0.0
    %646 = vmatprep.subr.mxu0 0.0
    %647 = vmatpush1.xpose.msra.mxu0 0.0
    %648 = vmatprep.subr.mxu0 0.0
    %649 = vmatpush1.xpose.msra.mxu0 0.0
    %650 = vmatprep.subr.mxu0 0.0
    %651 = vmatpush1.xpose.msra.mxu0 0.0
    %652 = vmatprep.subr.mxu0 0.0
    %653 = vmatpush1.xpose.msra.mxu0 0.0
    %654 = vmatprep.subr.mxu0 0.0
    %655 = vmatpush1.xpose.msra.mxu0 0.0
    %656 = vmatprep.subr.mxu0 0.0
    %657 = vmatpush1.xpose.msra.mxu0 0.0
    %658 = vmatprep.subr.mxu0 0.0
    %659 = vmatpush1.xpose.msra.mxu0 0.0
    %660 = vmatprep.subr.mxu0 0.0
    %661 = vmatpush1.xpose.msra.mxu0 0.0
    %662 = vmatprep.mubr.f32.mxu0 0.0
    %663 = vmatmul.mubr.f32.gmra.mrb[0].mxu0 %v593
    %v664 = vpop.f32.mrb[0].mxu0
    %v665 = vadd.f32 0.0, %v664
    %v666 = vpop.f32.mrb[0].mxu0
    %667 = vdwg.mxu0
    %v669 = vsel %vm90, %v591, 0
    %v672 = vsel %vm90, %v255, 0
    %674 = vmatprep.subr.mxu0 0.0
    %675 = vmatpush1.xpose.msra.mxu0 %v672
    %676 = vmatprep.subr.mxu0 0.0
    %677 = vmatpush1.xpose.msra.mxu0 0.0
    %678 = vmatprep.subr.mxu0 0.0
    %679 = vmatpush1.xpose.msra.mxu0 0.0
    %680 = vmatprep.subr.mxu0 0.0
    %681 = vmatpush1.xpose.msra.mxu0 0.0
    %682 = vmatprep.subr.mxu0 0.0
    %683 = vmatpush1.xpose.msra.mxu0 0.0
    %684 = vmatprep.subr.mxu0 0.0
    %685 = vmatpush1.xpose.msra.mxu0 0.0
    %686 = vmatprep.subr.mxu0 0.0
    %687 = vmatpush1.xpose.msra.mxu0 0.0
    %688 = vmatprep.subr.mxu0 0.0
    %689 = vmatpush1.xpose.msra.mxu0 0.0
    %690 = vmatprep.subr.mxu0 0.0
    %691 = vmatpush1.xpose.msra.mxu0 0.0
    %692 = vmatprep.subr.mxu0 0.0
    %693 = vmatpush1.xpose.msra.mxu0 0.0
    %694 = vmatprep.subr.mxu0 0.0
    %695 = vmatpush1.xpose.msra.mxu0 0.0
    %696 = vmatprep.subr.mxu0 0.0
    %697 = vmatpush1.xpose.msra.mxu0 0.0
    %698 = vmatprep.subr.mxu0 0.0
    %699 = vmatpush1.xpose.msra.mxu0 0.0
    %700 = vmatprep.subr.mxu0 0.0
    %701 = vmatpush1.xpose.msra.mxu0 0.0
    %702 = vmatprep.subr.mxu0 0.0
    %703 = vmatpush1.xpose.msra.mxu0 0.0
    %704 = vmatprep.subr.mxu0 0.0
    %705 = vmatpush1.xpose.msra.mxu0 0.0
    %706 = vmatprep.subr.mxu0 0.0
    %707 = vmatpush1.xpose.msra.mxu0 0.0
    %708 = vmatprep.subr.mxu0 0.0
    %709 = vmatpush1.xpose.msra.mxu0 0.0
    %710 = vmatprep.subr.mxu0 0.0
    %711 = vmatpush1.xpose.msra.mxu0 0.0
    %712 = vmatprep.subr.mxu0 0.0
    %713 = vmatpush1.xpose.msra.mxu0 0.0
    %714 = vmatprep.subr.mxu0 0.0
    %715 = vmatpush1.xpose.msra.mxu0 0.0
    %716 = vmatprep.subr.mxu0 0.0
    %717 = vmatpush1.xpose.msra.mxu0 0.0
    %718 = vmatprep.subr.mxu0 0.0
    %719 = vmatpush1.xpose.msra.mxu0 0.0
    %720 = vmatprep.subr.mxu0 0.0
    %721 = vmatpush1.xpose.msra.mxu0 0.0
    %722 = vmatprep.subr.mxu0 0.0
    %723 = vmatpush1.xpose.msra.mxu0 0.0
    %724 = vmatprep.subr.mxu0 0.0
    %725 = vmatpush1.xpose.msra.mxu0 0.0
    %726 = vmatprep.subr.mxu0 0.0
    %727 = vmatpush1.xpose.msra.mxu0 0.0
    %728 = vmatprep.subr.mxu0 0.0
    %729 = vmatpush1.xpose.msra.mxu0 0.0
    %730 = vmatprep.subr.mxu0 0.0
    %731 = vmatpush1.xpose.msra.mxu0 0.0
    %732 = vmatprep.subr.mxu0 0.0
    %733 = vmatpush1.xpose.msra.mxu0 0.0
    %734 = vmatprep.subr.mxu0 0.0
    %735 = vmatpush1.xpose.msra.mxu0 0.0
    %736 = vmatprep.subr.mxu0 0.0
    %737 = vmatpush1.xpose.msra.mxu0 0.0
    %738 = vmatprep.mubr.f32.mxu0 0.0
    %739 = vmatmul.mubr.f32.gmra.mrb[0].mxu0 %v669
    %v740 = vpop.f32.mrb[0].mxu0
    %v741 = vadd.f32 0.0, %v740
    %v742 = vpop.f32.mrb[0].mxu0
    %743 = vdwg.mxu0
    %vm744 = vcmask 64512
    %v745 = vsel %vm744, %v665, -inf
    %746 = vmax.xlane.f32.xlu0 %v745
    %v747 = vpop.xlane.xlu0 %746
    %v748 = vsel %vm744, %v741, -inf
    %749 = vmax.xlane.f32.xlu0 %v748
    %v750 = vpop.xlane.xlu0 %749
    %v751 = vsub.f32 %v665, %v747
    %v752 = vsub.f32 %v741, %v750
    %v753 = vmul.f32 %v751, 1.442695
    %v754 = vpow.pop %v753
    %v755 = vmul.f32 %v752, 1.442695
    %v756 = vpow.pop %v755
    %v757 = vsel %vm744, %v754, 0.0
    %758 = vadd.xlane.f32.xlu0 %v757
    %v759 = vpop.xlane.xlu0 %758
    %v760 = vsel %vm744, %v756, 0.0
    %761 = vadd.xlane.f32.xlu0 %v760
    %v762 = vpop.xlane.xlu0 %761
    %v764 = vsel %vm744, %v754, 0
    %766 = vmatprep.subr.mxu0 0.0
    %767 = vmatpush1.msra.mxu0 %v336
    %768 = vmatprep.subr.mxu0 0.0
    %769 = vmatpush1.msra.mxu0 0.0
    %770 = vmatprep.subr.mxu0 0.0
    %771 = vmatpush1.msra.mxu0 0.0
    %772 = vmatprep.subr.mxu0 0.0
    %773 = vmatpush1.msra.mxu0 0.0
    %774 = vmatprep.subr.mxu0 0.0
    %775 = vmatpush1.msra.mxu0 0.0
    %776 = vmatprep.subr.mxu0 0.0
    %777 = vmatpush1.msra.mxu0 0.0
    %778 = vmatprep.subr.mxu0 0.0
    %779 = vmatpush1.msra.mxu0 0.0
    %780 = vmatprep.subr.mxu0 0.0
    %781 = vmatpush1.msra.mxu0 0.0
    %782 = vmatprep.subr.mxu0 0.0
    %783 = vmatpush1.msra.mxu0 0.0
    %784 = vmatprep.subr.mxu0 0.0
    %785 = vmatpush1.msra.mxu0 0.0
    %786 = vmatprep.subr.mxu0 0.0
    %787 = vmatpush1.msra.mxu0 0.0
    %788 = vmatprep.subr.mxu0 0.0
    %789 = vmatpush1.msra.mxu0 0.0
    %790 = vmatprep.subr.mxu0 0.0
    %791 = vmatpush1.msra.mxu0 0.0
    %792 = vmatprep.subr.mxu0 0.0
    %793 = vmatpush1.msra.mxu0 0.0
    %794 = vmatprep.subr.mxu0 0.0
    %795 = vmatpush1.msra.mxu0 0.0
    %796 = vmatprep.subr.mxu0 0.0
    %797 = vmatpush1.msra.mxu0 0.0
    %798 = vmatprep.subr.mxu0 0.0
    %799 = vmatpush1.msra.mxu0 0.0
    %800 = vmatprep.subr.mxu0 0.0
    %801 = vmatpush1.msra.mxu0 0.0
    %802 = vmatprep.subr.mxu0 0.0
    %803 = vmatpush1.msra.mxu0 0.0
    %804 = vmatprep.subr.mxu0 0.0
    %805 = vmatpush1.msra.mxu0 0.0
    %806 = vmatprep.subr.mxu0 0.0
    %807 = vmatpush1.msra.mxu0 0.0
    %808 = vmatprep.subr.mxu0 0.0
    %809 = vmatpush1.msra.mxu0 0.0
    %810 = vmatprep.subr.mxu0 0.0
    %811 = vmatpush1.msra.mxu0 0.0
    %812 = vmatprep.subr.mxu0 0.0
    %813 = vmatpush1.msra.mxu0 0.0
    %814 = vmatprep.subr.mxu0 0.0
    %815 = vmatpush1.msra.mxu0 0.0
    %816 = vmatprep.subr.mxu0 0.0
    %817 = vmatpush1.msra.mxu0 0.0
    %818 = vmatprep.subr.mxu0 0.0
    %819 = vmatpush1.msra.mxu0 0.0
    %820 = vmatprep.subr.mxu0 0.0
    %821 = vmatpush1.msra.mxu0 0.0
    %822 = vmatprep.subr.mxu0 0.0
    %823 = vmatpush1.msra.mxu0 0.0
    %824 = vmatprep.subr.mxu0 0.0
    %825 = vmatpush1.msra.mxu0 0.0
    %826 = vmatprep.subr.mxu0 0.0
    %827 = vmatpush1.msra.mxu0 0.0
    %828 = vmatprep.subr.mxu0 0.0
    %829 = vmatpush1.msra.mxu0 0.0
    %830 = vmatprep.mubr.f32.mxu0 0.0
    %831 = vmatmul.mubr.f32.gmra.mrb[0].mxu0 %v764
    %v832 = vpop.f32.mrb[0].mxu0
    %v833 = vadd.f32 0.0, %v832
    %v834 = vpop.f32.mrb[0].mxu0
    %835 = vdwg.mxu0
    %v837 = vsel %vm744, %v756, 0
    %839 = vmatprep.subr.mxu0 0.0
    %840 = vmatpush1.msra.mxu0 %v341
    %841 = vmatprep.subr.mxu0 0.0
    %842 = vmatpush1.msra.mxu0 0.0
    %843 = vmatprep.subr.mxu0 0.0
    %844 = vmatpush1.msra.mxu0 0.0
    %845 = vmatprep.subr.mxu0 0.0
    %846 = vmatpush1.msra.mxu0 0.0
    %847 = vmatprep.subr.mxu0 0.0
    %848 = vmatpush1.msra.mxu0 0.0
    %849 = vmatprep.subr.mxu0 0.0
    %850 = vmatpush1.msra.mxu0 0.0
    %851 = vmatprep.subr.mxu0 0.0
    %852 = vmatpush1.msra.mxu0 0.0
    %853 = vmatprep.subr.mxu0 0.0
    %854 = vmatpush1.msra.mxu0 0.0
    %855 = vmatprep.subr.mxu0 0.0
    %856 = vmatpush1.msra.mxu0 0.0
    %857 = vmatprep.subr.mxu0 0.0
    %858 = vmatpush1.msra.mxu0 0.0
    %859 = vmatprep.subr.mxu0 0.0
    %860 = vmatpush1.msra.mxu0 0.0
    %861 = vmatprep.subr.mxu0 0.0
    %862 = vmatpush1.msra.mxu0 0.0
    %863 = vmatprep.subr.mxu0 0.0
    %864 = vmatpush1.msra.mxu0 0.0
    %865 = vmatprep.subr.mxu0 0.0
    %866 = vmatpush1.msra.mxu0 0.0
    %867 = vmatprep.subr.mxu0 0.0
    %868 = vmatpush1.msra.mxu0 0.0
    %869 = vmatprep.subr.mxu0 0.0
    %870 = vmatpush1.msra.mxu0 0.0
    %871 = vmatprep.subr.mxu0 0.0
    %872 = vmatpush1.msra.mxu0 0.0
    %873 = vmatprep.subr.mxu0 0.0
    %874 = vmatpush1.msra.mxu0 0.0
    %875 = vmatprep.subr.mxu0 0.0
    %876 = vmatpush1.msra.mxu0 0.0
    %877 = vmatprep.subr.mxu0 0.0
    %878 = vmatpush1.msra.mxu0 0.0
    %879 = vmatprep.subr.mxu0 0.0
    %880 = vmatpush1.msra.mxu0 0.0
    %881 = vmatprep.subr.mxu0 0.0
    %882 = vmatpush1.msra.mxu0 0.0
    %883 = vmatprep.subr.mxu0 0.0
    %884 = vmatpush1.msra.mxu0 0.0
    %885 = vmatprep.subr.mxu0 0.0
    %886 = vmatpush1.msra.mxu0 0.0
    %887 = vmatprep.subr.mxu0 0.0
    %888 = vmatpush1.msra.mxu0 0.0
    %889 = vmatprep.subr.mxu0 0.0
    %890 = vmatpush1.msra.mxu0 0.0
    %891 = vmatprep.subr.mxu0 0.0
    %892 = vmatpush1.msra.mxu0 0.0
    %893 = vmatprep.subr.mxu0 0.0
    %894 = vmatpush1.msra.mxu0 0.0
    %895 = vmatprep.subr.mxu0 0.0
    %896 = vmatpush1.msra.mxu0 0.0
    %897 = vmatprep.subr.mxu0 0.0
    %898 = vmatpush1.msra.mxu0 0.0
    %899 = vmatprep.subr.mxu0 0.0
    %900 = vmatpush1.msra.mxu0 0.0
    %901 = vmatprep.subr.mxu0 0.0
    %902 = vmatpush1.msra.mxu0 0.0
    %903 = vmatprep.mubr.f32.mxu0 0.0
    %904 = vmatmul.mubr.f32.gmra.mrb[0].mxu0 %v837
    %v905 = vpop.f32.mrb[0].mxu0
    %v906 = vadd.f32 0.0, %v905
    %v907 = vpop.f32.mrb[0].mxu0
    %908 = vdwg.mxu0
    %v909 = vrcp.pop %v759
    %v910 = vrcp.pop %v762
    %v911 = vmul.f32 %v833, %v909
    %v912 = vmul.f32 %v906, %v910
    %913 = vst.msk [vmem:[#allocation8] sm:$0xff] %vm90, %v911
    %914 = vst.msk [vmem:[#allocation8 + $0x8] sm:$0xff] %vm90, %v912
    // Predicated region
    $region66: #{tpu_custom_call.1} parent=1 // pred_check
      _
    $region67: #{tpu_custom_call.1} parent=1 // pred_check_branch
      %916 = sbr.rel (0) target = $region69
    $region68: #{tpu_custom_call.1} parent=1 // pred_region
      %s918 = ssub.s32 256, 256
      %919 = vsyncadd [#allocation5], %s918
      %s920 = sshll.u32 [#allocation8], 4
      %s921 = int_to_ptr.vmem [resolvable:$true] %s920
      %926 = dma.vmem_to_hbm [thread:$0]  %s921, 256, %s14, [#allocation5], 128, 128, 8
    $region69: #{tpu_custom_call.1} parent=1 // pred_fallthru
      _
    // Predicated region
    $region70: #{tpu_custom_call.1} parent=1 // pred_check
      _
    $region71: #{tpu_custom_call.1} parent=1 // pred_check_branch
      %928 = sbr.rel (0) target = $region73
    $region72: #{tpu_custom_call.1} parent=1 // pred_region
      %929 = dma.done [#allocation5], 256
    $region73: #{tpu_custom_call.1} parent=1 // pred_fallthru
      _
    %930 = vsyncpa [#allocation4], 1
    %931 = vsyncpa [#allocation7], 1
    %932 = vsyncpa [#allocation5], 1

</llo_original>
